<compile_context>
chip_gen: v6e
topology: v6e:2x2x1
jax: 0.10.0
libtpu: 0.0.40
codegen_flags: <defaults>
</compile_context>

<pallas_src>
import functools
import math

import jax
import jax.numpy as jnp
from jax.experimental import pallas as pl
from jax.experimental.pallas import tpu as pltpu


def _build_pe_buffer(d_model: int, max_len: int = 5000,
                     dtype=jnp.float32) -> jnp.ndarray:
    """Reference construction of the sinusoidal pe buffer (same as __init__)."""
    position = jnp.arange(max_len, dtype=jnp.float32)[:, None]            # [max_len, 1]
    div_term = jnp.exp(
        jnp.arange(0, d_model, 2, dtype=jnp.float32) * (-math.log(10000.0) / d_model)
    )                                                                      # [d_model//2]
    angles = position * div_term                                           # [max_len, d_model//2]
    pe = jnp.zeros((max_len, 1, d_model), dtype=jnp.float32)
    pe = pe.at[:, 0, 0::2].set(jnp.sin(angles))
    pe = pe.at[:, 0, 1::2].set(jnp.cos(angles))
    return pe.astype(dtype)


def _pe_add_kernel(x_ref, o_ref, *, block_seq: int, d_model: int):
    """x_ref/o_ref: [TS, B, D] tile. pe is computed on-chip and broadcast over B."""
    ts, _, d = x_ref.shape
    start = pl.program_id(0) * block_seq                      # first seq row of this tile

    # 2-D (sublane, lane) index grids — natively supported iota dimensions.
    pos = (start + jax.lax.broadcasted_iota(jnp.int32, (ts, d), 0)).astype(jnp.float32)
    feat = jax.lax.broadcasted_iota(jnp.int32, (ts, d), 1)
    odd = feat % 2
    # Per-lane frequency: exp((d - d%2) * (-ln(1e4)/d_model)) — identical values
    # to torch.exp(arange(0, d_model, 2) * (-ln(1e4)/d_model)) replicated per pair.
    inv_freq = jnp.exp((feat - odd).astype(jnp.float32) *
                       (-math.log(10000.0) / d_model))
    ang = pos * inv_freq
    pe = jnp.where(odd == 1, jnp.cos(ang), jnp.sin(ang))      # (ts, d), f32

    # Add in f32, broadcast over the batch (middle) axis, store in x dtype.
    o_ref[...] = (x_ref[...].astype(jnp.float32) + pe[:, None, :]).astype(o_ref.dtype)


def rope_positional_encoding(x: jnp.ndarray, *,
                             max_len: int = 5000,
                             block_seq: int | None = None,
                             vmem_budget_bytes: int | None = None,
                             donate_x: bool = False) -> jnp.ndarray:
    """x: [seq_len, batch, d_model] → x + pe[:seq_len], pe generated on-chip."""
    S, B, D = x.shape
    if S > max_len:
        raise ValueError(f"seq_len {S} exceeds pe max_len {max_len}")

    itemsize = jnp.dtype(x.dtype).itemsize
    bytes_per_row = 2 * B * D * itemsize          # x read + out write per seq row

    # Generation-aware VMEM sizing (v5e/v6e: 128 MiB, v7x: 64 MiB per TC).
    try:
        vmem_cap = int(pltpu.get_tpu_info().vmem_capacity_bytes)
    except Exception:  # fall back to the smallest (v7x) VMEM if query fails
        vmem_cap = 64 * 1024 * 1024

    if vmem_budget_bytes is None:
        # ~40% of physical VMEM for the double-buffered tiles:
        # ~25 MiB on v7x, 48 MiB on v5e/v6e — leaves headroom for scratch.
        vmem_budget_bytes = min(vmem_cap * 2 // 5, 48 * 1024 * 1024)

    # --- choose the seq tile ---------------------------------------------
    if block_seq is None:
        block_seq = max(1, vmem_budget_bytes // (2 * bytes_per_row))  # 2 = dbl buffer
        block_seq = min(block_seq, 2048)          # per-step overhead amortized by then
    # Keep >= ~8 grid steps for large S so the "parallel" seq axis can balance
    # across v7x's two TensorCores (no-op for tiny S / single-TC chips).
    block_seq = min(block_seq, max(8, pl.cdiv(S, 8)))
    block_seq = max(1, min(block_seq, S))
    # Equalize tiles so the final grid step isn't near-empty.
    n_steps = pl.cdiv(S, block_seq)
    block_seq = pl.cdiv(S, n_steps)
    grid = (pl.cdiv(S, block_seq),)

    # Tight explicit VMEM limit: double-buffered in+out tiles + small slack.
    block_bytes = 2 * block_seq * bytes_per_row
    vmem_limit = int(min(max(block_bytes + 4 * 1024 * 1024, 8 * 1024 * 1024),
                         max(vmem_cap * 3 // 5, 16 * 1024 * 1024)))

    cost = pl.CostEstimate(
        flops=S * B * D,                              # one add per element
        transcendentals=3 * S * D,                    # exp + sin + cos per (pos, d)
        bytes_accessed=2 * S * B * D * itemsize,      # x read + out write only
    )

    kernel = functools.partial(_pe_add_kernel, block_seq=block_seq, d_model=D)

    return pl.pallas_call(
        kernel,
        out_shape=jax.ShapeDtypeStruct((S, B, D), x.dtype),
        grid=grid,
        in_specs=[
            # x: tile over seq; batch/feature at full extent (lane-dense for
            # real model shapes with D % 128 == 0 and B >= 8/16).
            pl.BlockSpec((block_seq, B, D), lambda i: (i, 0, 0)),
        ],
        out_specs=pl.BlockSpec((block_seq, B, D), lambda i: (i, 0, 0)),
        compiler_params=pltpu.CompilerParams(
            dimension_semantics=("parallel",),        # shard seq tiles across TCs (v7x)
            vmem_limit_bytes=vmem_limit,
        ),
        cost_estimate=cost,
        input_output_aliases=({0: 0} if donate_x else {}),  # in-place if x donated
    )(x)


if __name__ == "__main__":
    seq_len, batch, d_model = 8, 2, 32
    max_len = 64  # small reference buffer for the check; semantics identical

    key = jax.random.PRNGKey(0)
    x = jax.random.normal(key, (seq_len, batch, d_model), dtype=jnp.float32)

    out = jax.block_until_ready(rope_positional_encoding(x, max_len=max_len))

    # Sanity-check against the pure-JAX reference of the same forward.
    pe = _build_pe_buffer(d_model, max_len)
    ref = x + pe[:seq_len]
    assert out.shape == (seq_len, batch, d_model)
    assert out.dtype == x.dtype
    assert jnp.allclose(out, ref, atol=1e-5, rtol=1e-5), "mismatch vs reference"

    print("KERNEL_OK")
</pallas_src>

<mosaic_0001>
module attributes {stable_mosaic.version = 11 : i64} {
  func.func @_pe_add_kernel(%arg0: i32, %arg1: memref<8x2x32xf32, #tpu.memory_space<vmem>>, %arg2: memref<8x2x32xf32, #tpu.memory_space<vmem>>) attributes {dimension_semantics = [#tpu.dimension_semantics<parallel>], iteration_bounds = array<i64: 1>, scalar_prefetch = 0 : i64, scratch_operands = 0 : i64, tpu.core_type = #tpu.core_type<tc>, window_params = [{transform_indices = @transform_0, window_bounds = array<i64: 8, 2, 32>}, {transform_indices = @transform_1, window_bounds = array<i64: 8, 2, 32>}]} {
    %c8_i32 = arith.constant 8 : i32
    %0 = arith.muli %arg0, %c8_i32 : i32
    %1 = tpu.iota {dimensions = array<i32: 0>} : vector<8x32xi32>
    %2 = vector.broadcast %0 : i32 to vector<8x32xi32>
    %3 = arith.addi %2, %1 : vector<8x32xi32>
    %4 = arith.sitofp %3 : vector<8x32xi32> to vector<8x32xf32>
    %5 = tpu.iota {dimensions = array<i32: 1>} : vector<8x32xi32>
    %c2_i32 = arith.constant 2 : i32
    %c0_i32 = arith.constant 0 : i32
    %6 = arith.cmpi eq, %c2_i32, %c0_i32 : i32
    %c1_i32 = arith.constant 1 : i32
    %7 = arith.select %6, %c1_i32, %c2_i32 : i32
    %8 = vector.broadcast %7 : i32 to vector<8x32xi32>
    %9 = arith.remsi %5, %8 : vector<8x32xi32>
    %c0_i32_0 = arith.constant 0 : i32
    %10 = vector.broadcast %c0_i32_0 : i32 to vector<8x32xi32>
    %11 = arith.cmpi ne, %9, %10 : vector<8x32xi32>
    %c0_i32_1 = arith.constant 0 : i32
    %12 = vector.broadcast %c0_i32_1 : i32 to vector<8x32xi32>
    %13 = arith.cmpi slt, %9, %12 : vector<8x32xi32>
    %c0_i32_2 = arith.constant 0 : i32
    %14 = arith.cmpi slt, %7, %c0_i32_2 : i32
    %15 = vector.broadcast %14 : i1 to vector<8x32xi1>
    %16 = vector.broadcast %15 : vector<8x32xi1> to vector<8x32xi1>
    %17 = arith.xori %13, %16 : vector<8x32xi1>
    %18 = arith.andi %17, %11 : vector<8x32xi1>
    %19 = vector.broadcast %7 : i32 to vector<8x32xi32>
    %20 = arith.addi %9, %19 : vector<8x32xi32>
    %21 = arith.select %18, %20, %9 : vector<8x32xi1>, vector<8x32xi32>
    %22 = arith.subi %5, %21 : vector<8x32xi32>
    %23 = arith.sitofp %22 : vector<8x32xi32> to vector<8x32xf32>
    %cst = arith.constant -0.287823141 : f32
    %24 = vector.broadcast %cst : f32 to vector<8x32xf32>
    %25 = arith.mulf %23, %24 : vector<8x32xf32>
    %26 = math.exp %25 : vector<8x32xf32>
    %27 = arith.mulf %4, %26 : vector<8x32xf32>
    %c1_i32_3 = arith.constant 1 : i32
    %28 = vector.broadcast %c1_i32_3 : i32 to vector<8x32xi32>
    %29 = arith.cmpi eq, %21, %28 : vector<8x32xi32>
    %30 = math.cos %27 : vector<8x32xf32>
    %31 = math.sin %27 : vector<8x32xf32>
    %32 = arith.select %29, %30, %31 : vector<8x32xi1>, vector<8x32xf32>
    %c0 = arith.constant 0 : index
    %c0_4 = arith.constant 0 : index
    %c0_5 = arith.constant 0 : index
    %33 = vector.load %arg1[%c0, %c0_4, %c0_5] : memref<8x2x32xf32, #tpu.memory_space<vmem>>, vector<8x2x32xf32>
    %34 = vector.shape_cast %32 : vector<8x32xf32> to vector<8x1x32xf32>
    %35 = vector.broadcast %34 : vector<8x1x32xf32> to vector<8x2x32xf32>
    %36 = arith.addf %33, %35 : vector<8x2x32xf32>
    %c0_6 = arith.constant 0 : index
    %c0_7 = arith.constant 0 : index
    %c0_8 = arith.constant 0 : index
    %37 = vector.load %arg2[%c0_6, %c0_7, %c0_8] : memref<8x2x32xf32, #tpu.memory_space<vmem>>, vector<8x2x32xf32>
    tpu.vector_store %arg2[%c0_6, %c0_7, %c0_8], %36 {strides = array<i32>} : memref<8x2x32xf32, #tpu.memory_space<vmem>>, vector<8x2x32xf32>,
    return
  }
  func.func @transform_0(%arg0: i32) -> (i32, i32, i32) {
    %c0_i32 = arith.constant 0 : i32
    %c0_i32_0 = arith.constant 0 : i32
    %c0_i32_1 = arith.constant 0 : i32
    return %arg0, %c0_i32, %c0_i32_0 : i32, i32, i32
  }
  func.func @transform_1(%arg0: i32) -> (i32, i32, i32) {
    %c0_i32 = arith.constant 0 : i32
    %c0_i32_0 = arith.constant 0 : i32
    %c0_i32_1 = arith.constant 0 : i32
    return %arg0, %c0_i32, %c0_i32_0 : i32, i32, i32
  }
}

</mosaic_0001>

<llo_original>
// kernel: tpu_custom_call.1
$region0: #{tpu_custom_call.1}
  #allocation0 [shape = 'u32[]', space=smem, size = 0x4, offset = 0x4, fixed_abs, tag = 'smem constant byte address 0x4 - core index']
  #allocation1 [shape = 'u32[144,128]{1,0:T(1,128)}', space=vmem, size = 0x12000, scoped, tag = 'internal scratch']
  %s0 = inlined_call_operand.hbm [shape: f32[8,2,32], index: 0, kind: input, shape index: {}]
  %s1 = inlined_call_operand.hbm [shape: f32[8,2,32], index: 1, kind: output, shape index: {}]
  %s2 = sld [smem:[#allocation0]]
  $region18: #{tpu_custom_call.1} parent=0
    _
  %s4 = ssub.s32 1, %s2
  %s5 = scalar_select 0, %s4, %s2
  $region1: #{tpu_custom_call.1} parent=0
    #allocation2 [shape = 'u8[8192]{0}', space=vmem, size = 0x2000, scoped, tag = 'input window, operand 0, single buffered']
    #allocation3 [shape = 's32[1]{0}', space=sflag, size = 0x4, scoped, tag = 'scoped memory for tpu_custom_call.1']
    #allocation4 [shape = 's32[1]{0}', space=sflag, size = 0x4, scoped, tag = 'scoped memory for tpu_custom_call.1']
    #allocation5 [shape = 'u8[8192]{0}', space=vmem, size = 0x2000, scoped, tag = 'output window, operand 0, single buffered']
    %6 = vsyncpa [#allocation3], 0
    %7 = vsyncpa [#allocation4], 0
    // Predicated region
    $region2: #{tpu_custom_call.1} parent=1 // pred_check
      _
    $region3: #{tpu_custom_call.1} parent=1 // pred_check_branch
      %9 = sbr.rel (0) target = $region5
    $region4: #{tpu_custom_call.1} parent=1 // pred_region
      %s11 = ssub.s32 256, 256
      %12 = vsyncadd [#allocation3], %s11
      %s13 = sshll.u32 [#allocation2], 4
      %s14 = int_to_ptr.vmem [resolvable:$true] %s13
      %19 = dma.hbm_to_vmem [thread:$0]  %s0, 256, %s14, [#allocation3], 32, 32, 2
    $region5: #{tpu_custom_call.1} parent=1 // pred_fallthru
      _
    // Predicated region
    $region6: #{tpu_custom_call.1} parent=1 // pred_check
      _
    $region7: #{tpu_custom_call.1} parent=1 // pred_check_branch
      %21 = sbr.rel (0) target = $region9
    $region8: #{tpu_custom_call.1} parent=1 // pred_region
      %22 = dma.done [#allocation3], 256
    $region9: #{tpu_custom_call.1} parent=1 // pred_fallthru
      _
    %s23 = smul.u32 0, 8
    %v24 = vlaneseq
    %v25 = vshrl.u32 %v24, 7
    %v26 = vstv %s23
    %v27 = vadd.s32 %v26, %v25
    %v28 = vcvt.s32.f32 %v27
    %v29 = vlaneseq
    %v30 = vand.u32 %v29, 127
    %vm31 = vcmp.lt.s32.totalorder %v30, 0
    %v32 = vsub.s32 0, %v30
    %v33 = vsel %vm31, %v32, %v30
    %v34 = vshrl.u32 %v33, 1
    %v35 = vand.u32 %v33, 1
    %v36 = vsub.s32 0, %v35
    %v37 = vsel %vm31, %v36, %v35
    %vm38 = vcmp.ne.s32.totalorder %v37, 0
    %vm39 = vcmp.lt.s32.totalorder %v37, 0
    %vm40 = vmand %vm39, %vm38
    %v41 = vadd.s32 %v37, 2
    %v42 = vsel %vm40, %v41, %v37
    %v43 = vsub.s32 %v30, %v42
    %v44 = vcvt.s32.f32 %v43
    %v45 = vmul.f32 %v44, -0.28782314
    %v46 = vmul.f32 %v45, 1.442695
    %v47 = vpow.pop %v46
    %v48 = vmul.f32 %v28, %v47
    %vm49 = vcmp.eq.s32.totalorder %v42, 1
    %v50 = vand.u32 2147483647, %v48
    %vm51 = vcmp.le.f32.partialorder %v50, 0.7853982
    %vm52 = vcmp.lt.s32.totalorder %v48, 0
    %v53 = vand.u32 %v48, 2139095040
    %v54 = vshrl.u32 %v53, 23
    %v55 = vsub.s32 %v54, 127
    %v56 = vand.u32 2147483647, %v48
    %v57 = vand.u32 %v56, 8388607
    %v58 = vor.u32 %v57, 8388608
    %v59 = vsub.s32 0, %v58
    %v60 = vadd.s32 %v55, 1
    %vm61 = vcmp.gt.s32.totalorder %v60, 0
    %v62 = vsel %vm61, %v60, 0
    %v63 = vshrl.u32 %v62, 5
    %v64 = vand.u32 %v62, 31
    %v65 = vsub.s32 32, %v64
    %v66 = vshrl.u32 683565275, %v65
    %v67 = vshll.u32 683565275, %v64
    %v68 = vshrl.u32 2475754826, %v65
    %v69 = vor.u32 %v67, %v68
    %v70 = vshll.u32 2475754826, %v64
    %v71 = vshrl.u32 2131351028, %v65
    %v72 = vor.u32 %v70, %v71
    %v73 = vshll.u32 2131351028, %v64
    %v74 = vshrl.u32 2102212464, %v65
    %v75 = vor.u32 %v73, %v74
    %v76 = vshll.u32 2102212464, %v64
    %v77 = vshrl.u32 920167782, %v65
    %v78 = vor.u32 %v76, %v77
    %v79 = vshll.u32 920167782, %v64
    %v80 = vshrl.u32 1326507024, %v65
    %v81 = vor.u32 %v79, %v80
    %vm82 = vcmp.lt.s32.totalorder %v63, 1
    %vm83 = vcmp.lt.s32.totalorder %v63, 2
    %vm84 = vcmp.lt.s32.totalorder %v63, 3
    %vm85 = vcmp.lt.s32.totalorder %v63, 4
    %v86 = vsel %vm82, %v66, %v69
    %v87 = vsel %vm85, %v75, 2102212464
    %v88 = vsel %vm84, %v72, %v87
    %v89 = vsel %vm83, %v86, %v88
    %v90 = vsel %vm82, %v69, %v72
    %v91 = vsel %vm85, %v78, 920167782
    %v92 = vsel %vm84, %v75, %v91
    %v93 = vsel %vm83, %v90, %v92
    %v94 = vsel %vm82, %v72, %v75
    %v95 = vsel %vm85, %v81, 1326507024
    %v96 = vsel %vm84, %v78, %v95
    %v97 = vsel %vm83, %v94, %v96
    %v98 = vshll.u32 %v58, 8
    %v99 = vmul.u32.u64.compose %v98, %v97
    %v100 = vextract.low.u32 %v99
    %v101 = vextract.high.u32 %v99
    %v102 = vmul.u32.u64.compose %v98, %v93
    %v103 = vextract.low.u32 %v102
    %v104 = vextract.high.u32 %v102
    %v105 = vmul.u32 %v98, %v89
    %v106 = vadd.s32 %v101, %v103
    %vm107 = vc.u32 %v101, %v103
    %v108 = vadd.s32 %v104, 1
    %v109 = vsel %vm107, %v108, %v104
    %v110 = vadd.s32 %v105, %v109
    %v111 = vadd.s32 %v110, 536870912
    %v112 = vshrl.u32 %v111, 30
    %v113 = vshll.u32 %v112, 30
    %v114 = vsub.s32 %v110, %v113
    %vm115 = vcmp.lt.s32.totalorder %v114, 0
    %v116 = vsub.s32 0, %v114
    %v117 = vsel %vm115, %v116, %v114
    %v118 = vclz %v117
    %v119 = vsub.s32 %v118, 2
    %vm120 = vcmp.gt.s32.totalorder 0, %v119
    %v121 = vsel %vm120, 0, %v119
    %v122 = vsub.s32 32, %v121
    %v123 = vshll.u32 %v114, %v121
    %v124 = vshrl.u32 %v106, %v122
    %v125 = vor.u32 %v123, %v124
    %v126 = vsub.s32 4294967266, %v121
    %v127 = vadd.s32 %v126, 127
    %v128 = vshll.u32 %v127, 23
    %v129 = vor.u32 4788187, %v128
    %v130 = vand.u32 2147483647, %v129
    %v132 = vcvt.s32.f32 %v125
    %v133 = vmul.f32 %v132, %v130
    %v134 = vxor.u32 %v133, 2147483648
    %v135 = vsel %vm52, %v134, %v133
    %v136 = vsub.s32 4, %v112
    %v137 = vsel %vm52, %v136, %v112
    %v138 = vsel %vm51, %v48, %v135
    %v139 = vsel %vm51, 0, %v137
    %v140 = vcosq.f32.pop %v138
    %v141 = vsinq.f32.pop %v138
    %vm142 = vweird.f32 %v48
    %v143 = vand.u32 %v139, 3
    %vm144 = vcmp.lt.s32.totalorder %v143, 2
    %vm145 = vcmp.eq.s32.totalorder %v143, 0
    %v146 = vxor.u32 %v141, 2147483648
    %v147 = vsel %vm145, %v140, %v146
    %vm148 = vcmp.eq.s32.totalorder %v143, 2
    %v149 = vxor.u32 %v140, 2147483648
    %v150 = vsel %vm148, %v149, %v141
    %v151 = vsel %vm144, %v147, %v150
    %v152 = vsel %vm142, nan, %v151
    %v153 = vand.u32 2147483647, %v48
    %vm154 = vcmp.le.f32.partialorder %v153, 0.7853982
    %vm155 = vcmp.lt.s32.totalorder %v48, 0
    %v156 = vand.u32 %v48, 2139095040
    %v157 = vshrl.u32 %v156, 23
    %v158 = vsub.s32 %v157, 127
    %v159 = vand.u32 2147483647, %v48
    %v160 = vand.u32 %v159, 8388607
    %v161 = vor.u32 %v160, 8388608
    %v162 = vsub.s32 0, %v161
    %v163 = vadd.s32 %v158, 1
    %vm164 = vcmp.gt.s32.totalorder %v163, 0
    %v165 = vsel %vm164, %v163, 0
    %v166 = vshrl.u32 %v165, 5
    %v167 = vand.u32 %v165, 31
    %v168 = vsub.s32 32, %v167
    %v169 = vshrl.u32 683565275, %v168
    %v170 = vshll.u32 683565275, %v167
    %v171 = vshrl.u32 2475754826, %v168
    %v172 = vor.u32 %v170, %v171
    %v173 = vshll.u32 2475754826, %v167
    %v174 = vshrl.u32 2131351028, %v168
    %v175 = vor.u32 %v173, %v174
    %v176 = vshll.u32 2131351028, %v167
    %v177 = vshrl.u32 2102212464, %v168
    %v178 = vor.u32 %v176, %v177
    %v179 = vshll.u32 2102212464, %v167
    %v180 = vshrl.u32 920167782, %v168
    %v181 = vor.u32 %v179, %v180
    %v182 = vshll.u32 920167782, %v167
    %v183 = vshrl.u32 1326507024, %v168
    %v184 = vor.u32 %v182, %v183
    %vm185 = vcmp.lt.s32.totalorder %v166, 1
    %vm186 = vcmp.lt.s32.totalorder %v166, 2
    %vm187 = vcmp.lt.s32.totalorder %v166, 3
    %vm188 = vcmp.lt.s32.totalorder %v166, 4
    %v189 = vsel %vm185, %v169, %v172
    %v190 = vsel %vm188, %v178, 2102212464
    %v191 = vsel %vm187, %v175, %v190
    %v192 = vsel %vm186, %v189, %v191
    %v193 = vsel %vm185, %v172, %v175
    %v194 = vsel %vm188, %v181, 920167782
    %v195 = vsel %vm187, %v178, %v194
    %v196 = vsel %vm186, %v193, %v195
    %v197 = vsel %vm185, %v175, %v178
    %v198 = vsel %vm188, %v184, 1326507024
    %v199 = vsel %vm187, %v181, %v198
    %v200 = vsel %vm186, %v197, %v199
    %v201 = vshll.u32 %v161, 8
    %v202 = vmul.u32.u64.compose %v201, %v200
    %v203 = vextract.low.u32 %v202
    %v204 = vextract.high.u32 %v202
    %v205 = vmul.u32.u64.compose %v201, %v196
    %v206 = vextract.low.u32 %v205
    %v207 = vextract.high.u32 %v205
    %v208 = vmul.u32 %v201, %v192
    %v209 = vadd.s32 %v204, %v206
    %vm210 = vc.u32 %v204, %v206
    %v211 = vadd.s32 %v207, 1
    %v212 = vsel %vm210, %v211, %v207
    %v213 = vadd.s32 %v208, %v212
    %v214 = vadd.s32 %v213, 536870912
    %v215 = vshrl.u32 %v214, 30
    %v216 = vshll.u32 %v215, 30
    %v217 = vsub.s32 %v213, %v216
    %vm218 = vcmp.lt.s32.totalorder %v217, 0
    %v219 = vsub.s32 0, %v217
    %v220 = vsel %vm218, %v219, %v217
    %v221 = vclz %v220
    %v222 = vsub.s32 %v221, 2
    %vm223 = vcmp.gt.s32.totalorder 0, %v222
    %v224 = vsel %vm223, 0, %v222
    %v225 = vsub.s32 32, %v224
    %v226 = vshll.u32 %v217, %v224
    %v227 = vshrl.u32 %v209, %v225
    %v228 = vor.u32 %v226, %v227
    %v229 = vsub.s32 4294967266, %v224
    %v230 = vadd.s32 %v229, 127
    %v231 = vshll.u32 %v230, 23
    %v232 = vor.u32 4788187, %v231
    %v233 = vand.u32 2147483647, %v232
    %v235 = vcvt.s32.f32 %v228
    %v236 = vmul.f32 %v235, %v233
    %v237 = vxor.u32 %v236, 2147483648
    %v238 = vsel %vm155, %v237, %v236
    %v239 = vsub.s32 4, %v215
    %v240 = vsel %vm155, %v239, %v215
    %v241 = vsel %vm154, %v48, %v238
    %v242 = vsel %vm154, 0, %v240
    %v243 = vcosq.f32.pop %v241
    %v244 = vsinq.f32.pop %v241
    %vm245 = vweird.f32 %v48
    %v246 = vadd.s32 %v242, 3
    %v247 = vand.u32 %v246, 3
    %vm248 = vcmp.lt.s32.totalorder %v247, 2
    %vm249 = vcmp.eq.s32.totalorder %v247, 0
    %v250 = vxor.u32 %v244, 2147483648
    %v251 = vsel %vm249, %v243, %v250
    %vm252 = vcmp.eq.s32.totalorder %v247, 2
    %v253 = vxor.u32 %v243, 2147483648
    %v254 = vsel %vm252, %v253, %v244
    %v255 = vsel %vm248, %v251, %v254
    %v256 = vsel %vm245, nan, %v255
    %v257 = vsel %vm49, %v152, %v256
    %v258 = vld [vmem:[#allocation2] sm:$0x3]
    %v259 = vld [vmem:[#allocation2 + $0x2] sm:$0x3]
    %v260 = vld [vmem:[#allocation2 + $0x4] sm:$0x3]
    %v261 = vld [vmem:[#allocation2 + $0x6] sm:$0x3]
    %v262 = vld [vmem:[#allocation2 + $0x8] sm:$0x3]
    %v263 = vld [vmem:[#allocation2 + $0xa] sm:$0x3]
    %v264 = vld [vmem:[#allocation2 + $0xc] sm:$0x3]
    %v265 = vld [vmem:[#allocation2 + $0xe] sm:$0x3]
    %v267 = vcombine.high %v257, %v257
    %v269 = vunpack.c.l.s4 1966171168
    %v270 = vunpack.c.0.s8 %v269
    %v271 = vlaneseq
    %v272 = vshrl.u32 %v271, 7
    %v273 = vsub.s32 %v270, %v272
    %v274 = vrot.slane %v257, %v273
    %v276 = vunpack.c.l.s4 1966171168
    %v277 = vunpack.c.0.s8 %v276
    %v278 = vlaneseq
    %v279 = vshrl.u32 %v278, 7
    %v280 = vsub.s32 %v277, %v279
    %v281 = vrot.slane %v267, %v280
    %v282 = vcombine.high %v274, %v274
    %v283 = vcombine.high %v281, %v281
    %v285 = vunpack.c.l.s4 1966171168
    %v286 = vunpack.c.0.s8 %v285
    %v287 = vlaneseq
    %v288 = vshrl.u32 %v287, 7
    %v289 = vsub.s32 %v286, %v288
    %v290 = vrot.slane %v274, %v289
    %v292 = vunpack.c.l.s4 1966171168
    %v293 = vunpack.c.0.s8 %v292
    %v294 = vlaneseq
    %v295 = vshrl.u32 %v294, 7
    %v296 = vsub.s32 %v293, %v295
    %v297 = vrot.slane %v281, %v296
    %v299 = vunpack.c.l.s4 1966171168
    %v300 = vunpack.c.0.s8 %v299
    %v301 = vlaneseq
    %v302 = vshrl.u32 %v301, 7
    %v303 = vsub.s32 %v300, %v302
    %v304 = vrot.slane %v282, %v303
    %v306 = vunpack.c.l.s4 1966171168
    %v307 = vunpack.c.0.s8 %v306
    %v308 = vlaneseq
    %v309 = vshrl.u32 %v308, 7
    %v310 = vsub.s32 %v307, %v309
    %v311 = vrot.slane %v283, %v310
    %v312 = vcombine.high %v290, %v290
    %v313 = vcombine.high %v297, %v297
    %v314 = vcombine.high %v304, %v304
    %v315 = vcombine.high %v311, %v311
    %v316 = vlaneseq
    %v317 = vshrl.u32 %v316, 7
    %v318 = vsub.s32 0, %v317
    %v319 = vrot.slane %v290, %v318
    %v320 = vlaneseq
    %v321 = vshrl.u32 %v320, 7
    %v322 = vsub.s32 0, %v321
    %v323 = vrot.slane %v304, %v322
    %v324 = vlaneseq
    %v325 = vshrl.u32 %v324, 7
    %v326 = vsub.s32 0, %v325
    %v327 = vrot.slane %v312, %v326
    %v328 = vlaneseq
    %v329 = vshrl.u32 %v328, 7
    %v330 = vsub.s32 0, %v329
    %v331 = vrot.slane %v314, %v330
    %v332 = vlaneseq
    %v333 = vshrl.u32 %v332, 7
    %v334 = vsub.s32 0, %v333
    %v335 = vrot.slane %v297, %v334
    %v336 = vlaneseq
    %v337 = vshrl.u32 %v336, 7
    %v338 = vsub.s32 0, %v337
    %v339 = vrot.slane %v311, %v338
    %v340 = vlaneseq
    %v341 = vshrl.u32 %v340, 7
    %v342 = vsub.s32 0, %v341
    %v343 = vrot.slane %v313, %v342
    %v344 = vlaneseq
    %v345 = vshrl.u32 %v344, 7
    %v346 = vsub.s32 0, %v345
    %v347 = vrot.slane %v315, %v346
    %v356 = vadd.f32 %v258, %v319
    %v357 = vadd.f32 %v259, %v323
    %v358 = vadd.f32 %v260, %v327
    %v359 = vadd.f32 %v261, %v331
    %v360 = vadd.f32 %v262, %v335
    %v361 = vadd.f32 %v263, %v339
    %v362 = vadd.f32 %v264, %v343
    %v363 = vadd.f32 %v265, %v347
    %vm364 = vcmask 254976
    %365 = vst.msk [vmem:[#allocation5] sm:$0x3] %vm364, %v356
    %366 = vst.msk [vmem:[#allocation5 + $0x2] sm:$0x3] %vm364, %v357
    %367 = vst.msk [vmem:[#allocation5 + $0x4] sm:$0x3] %vm364, %v358
    %368 = vst.msk [vmem:[#allocation5 + $0x6] sm:$0x3] %vm364, %v359
    %369 = vst.msk [vmem:[#allocation5 + $0x8] sm:$0x3] %vm364, %v360
    %370 = vst.msk [vmem:[#allocation5 + $0xa] sm:$0x3] %vm364, %v361
    %371 = vst.msk [vmem:[#allocation5 + $0xc] sm:$0x3] %vm364, %v362
    %372 = vst.msk [vmem:[#allocation5 + $0xe] sm:$0x3] %vm364, %v363
    // Predicated region
    $region10: #{tpu_custom_call.1} parent=1 // pred_check
      _
    $region11: #{tpu_custom_call.1} parent=1 // pred_check_branch
      %374 = sbr.rel (0) target = $region13
    $region12: #{tpu_custom_call.1} parent=1 // pred_region
      %s376 = ssub.s32 256, 256
      %377 = vsyncadd [#allocation4], %s376
      %s378 = sshll.u32 [#allocation5], 4
      %s379 = int_to_ptr.vmem [resolvable:$true] %s378
      %384 = dma.vmem_to_hbm [thread:$0]  %s379, 256, %s1, [#allocation4], 32, 32, 2
    $region13: #{tpu_custom_call.1} parent=1 // pred_fallthru
      _
    // Predicated region
    $region14: #{tpu_custom_call.1} parent=1 // pred_check
      _
    $region15: #{tpu_custom_call.1} parent=1 // pred_check_branch
      %386 = sbr.rel (0) target = $region17
    $region16: #{tpu_custom_call.1} parent=1 // pred_region
      %387 = dma.done [#allocation4], 256
    $region17: #{tpu_custom_call.1} parent=1 // pred_fallthru
      _
    %388 = vsyncpa [#allocation3], 1
    %389 = vsyncpa [#allocation4], 1

</llo_original>
